<compile_context>
chip_gen: v5e
topology: v5e:2x2
jax: 0.10.0
libtpu: 0.0.40
codegen_flags: <defaults>
</compile_context>

<pallas_src>
import jax
import jax.numpy as jnp
from jax import lax
from jax.experimental import pallas as pl
from jax.experimental.pallas import tpu as pltpu

ALPHA = 0.4
BETA = 0.4
GAMMA = 0.2


def _simplified_loss_kernel(src_ref, dst_ref, node_pred_ref, node_target_ref,
                            inter_ref, out_ref, dst_oh_ref, acc_ref):
    i = pl.program_id(0)
    n_blocks = pl.num_programs(0)
    tm = inter_ref.shape[0]
    e_pad, n = dst_oh_ref.shape

    # ---- step 0: node loss, temporal loss, dst one-hot, accumulator init ----
    @pl.when(i == 0)
    def _():
        npred = node_pred_ref[...].astype(jnp.float32)
        ntgt = node_target_ref[...].astype(jnp.float32)
        ndiff = npred - ntgt
        n_rows, n_feat = ndiff.shape
        acc_ref[0] = jnp.mean(ndiff * ndiff)                       # node loss

        # temporal: (p[1:]-p[:-1]) - (t[1:]-t[:-1]) == ndiff[r+1] - ndiff[r]
        # XLU roll + mask instead of two unaligned sublane slices.
        rolled = pltpu.roll(ndiff, shift=n_rows - 1, axis=0)       # rolled[r] = ndiff[(r+1) % N]
        tdiff = rolled - ndiff
        row_id = lax.broadcasted_iota(jnp.int32, (n_rows, n_feat), 0)
        tsq = jnp.where(row_id < (n_rows - 1), tdiff * tdiff, 0.0)
        acc_ref[1] = jnp.sum(tsq) / ((n_rows - 1) * n_feat)        # temporal loss

        # dst one-hot [E_pad, N], bf16, pre-transposed; -1 pad never matches.
        col_iota = lax.broadcasted_iota(jnp.int32, (e_pad, n), 1)
        dst_oh_ref[...] = (col_iota == dst_ref[...]).astype(jnp.bfloat16)

        acc_ref[2] = 0.0                                           # interaction SSE

    # ---- every step: interaction SSE for this row block ---------------------
    row_iota = lax.broadcasted_iota(jnp.int32, (tm, e_pad), 0) + i * tm
    src_oh = (row_iota == src_ref[...]).astype(jnp.bfloat16)       # [TM, E_pad]
    counts = lax.dot_general(
        src_oh, dst_oh_ref[...],
        dimension_numbers=(((1,), (0,)), ((), ())),
        preferred_element_type=jnp.float32)                        # [TM, N]
    true_adj = jnp.minimum(counts, 1.0)        # duplicate edges -> still 1.0
    idiff = inter_ref[...].astype(jnp.float32) - true_adj
    acc_ref[2] += jnp.sum(idiff * idiff)

    # ---- last step: finalize -------------------------------------------------
    @pl.when(i == n_blocks - 1)
    def _():
        node_loss = acc_ref[0]
        temp_loss = acc_ref[1]
        inter_loss = acc_ref[2] / (n * n)
        out_ref[0] = ALPHA * node_loss + BETA * inter_loss + GAMMA * temp_loss
        out_ref[1] = node_loss
        out_ref[2] = inter_loss
        out_ref[3] = temp_loss


def _pick_row_block(n, target=256):
    """Largest row block <= target that tiles N cleanly ((8,128) rule safe)."""
    if n <= target:
        return n
    for tm in range(target, 7, -8):
        if n % tm == 0:
            return tm
    return n  # fall back to a single block


def simplified_loss(node_pred, node_target, interaction_pred, true_edge_index):
    """Returns (total_loss, {'node':..., 'interaction':..., 'temporal':...})."""
    n, f = node_pred.shape

    # Pad edge list to a lane-dense multiple of 128; -1 sentinel never matches
    # the in-kernel iota, so padded edges are inert. dst is passed as a column
    # so the dst one-hot is built pre-transposed (no in-kernel XLU transpose).
    e = true_edge_index.shape[1]
    e_pad = max(128, -(-e // 128) * 128)
    src = jnp.full((1, e_pad), -1, jnp.int32).at[0, :e].set(
        true_edge_index[0].astype(jnp.int32))
    dst = jnp.full((e_pad, 1), -1, jnp.int32).at[:e, 0].set(
        true_edge_index[1].astype(jnp.int32))

    tm = _pick_row_block(n)
    n_blocks = n // tm

    cost = pl.CostEstimate(
        flops=2 * n * n * e_pad,
        transcendentals=0,
        bytes_accessed=4 * (n * n + 2 * n * f) + 4 * 2 * e_pad + 16)

    out = pl.pallas_call(
        _simplified_loss_kernel,
        out_shape=jax.ShapeDtypeStruct((4,), jnp.float32),
        grid=(n_blocks,),
        in_specs=[
            pl.BlockSpec((1, e_pad), lambda i: (0, 0)),      # src ids   [1, E_pad]
            pl.BlockSpec((e_pad, 1), lambda i: (0, 0)),      # dst ids   [E_pad, 1]
            pl.BlockSpec((n, f), lambda i: (0, 0)),          # node_pred (resident)
            pl.BlockSpec((n, f), lambda i: (0, 0)),          # node_target (resident)
            pl.BlockSpec((tm, n), lambda i: (i, 0)),         # interaction row block
        ],
        out_specs=pl.BlockSpec(memory_space=pltpu.MemorySpace.SMEM),
        scratch_shapes=[
            pltpu.VMEM((e_pad, n), jnp.bfloat16),            # dst one-hot (resident)
            pltpu.SMEM((4,), jnp.float32),                   # loss / SSE accumulators
        ],
        # Row axis carries the SMEM accumulator -> must stay sequential.
        compiler_params=pltpu.CompilerParams(
            dimension_semantics=("arbitrary",)),
        cost_estimate=cost,
    )(src, dst, node_pred, node_target, interaction_pred)

    total = out[0]
    components = {
        'node': out[1],
        'interaction': out[2],
        'temporal': out[3],
    }
    # TODO(synk): the PyTorch module calls .item() on the components (host
    # scalars); we return device scalars instead so the fn stays traceable.
    return total, components


def _reference(node_pred, node_target, interaction_pred, true_edge_index):
    node_loss = jnp.mean((node_pred - node_target) ** 2)
    n = node_pred.shape[0]
    true_adj = jnp.zeros((n, n), jnp.float32).at[
        true_edge_index[0], true_edge_index[1]].set(1.0)
    inter_loss = jnp.mean((interaction_pred - true_adj) ** 2)
    dp = node_pred[1:] - node_pred[:-1]
    dt = node_target[1:] - node_target[:-1]
    temp_loss = jnp.mean((dp - dt) ** 2)
    total = ALPHA * node_loss + BETA * inter_loss + GAMMA * temp_loss
    return total, node_loss, inter_loss, temp_loss


if __name__ == "__main__":
    key = jax.random.PRNGKey(0)
    k1, k2, k3, k4, k5 = jax.random.split(key, 5)

    N = 16   # number of nodes
    F = 32   # node feature dim
    E = 20   # number of true edges (duplicates possible; kernel handles them)

    node_pred = jax.random.normal(k1, (N, F), dtype=jnp.float32)
    node_target = jax.random.normal(k2, (N, F), dtype=jnp.float32)
    interaction_pred = jax.random.uniform(k3, (N, N), dtype=jnp.float32)
    src = jax.random.randint(k4, (E,), 0, N, dtype=jnp.int32)
    dst = jax.random.randint(k5, (E,), 0, N, dtype=jnp.int32)
    true_edge_index = jnp.stack([src, dst], axis=0)  # [2, E]

    total, comps = simplified_loss(node_pred, node_target,
                                   interaction_pred, true_edge_index)
    total = jax.block_until_ready(total)

    ref_total, ref_node, ref_inter, ref_temp = _reference(
        node_pred, node_target, interaction_pred, true_edge_index)

    assert jnp.allclose(total, ref_total, rtol=1e-5, atol=1e-5)
    assert jnp.allclose(comps['node'], ref_node, rtol=1e-5, atol=1e-5)
    assert jnp.allclose(comps['interaction'], ref_inter, rtol=1e-5, atol=1e-5)
    assert jnp.allclose(comps['temporal'], ref_temp, rtol=1e-5, atol=1e-5)

    print("KERNEL_OK")
</pallas_src>

<mosaic_0001>
module attributes {stable_mosaic.version = 11 : i64} {
  func.func @_simplified_loss_kernel(%arg0: i32, %arg1: memref<1x128xi32, #tpu.memory_space<vmem>>, %arg2: memref<128x1xi32, #tpu.memory_space<vmem>>, %arg3: memref<16x32xf32, #tpu.memory_space<vmem>>, %arg4: memref<16x32xf32, #tpu.memory_space<vmem>>, %arg5: memref<16x16xf32, #tpu.memory_space<vmem>>, %arg6: memref<4xf32, #tpu.memory_space<smem>>, %arg7: memref<128x16xbf16, #tpu.memory_space<vmem>>, %arg8: memref<4xf32, #tpu.memory_space<smem>>) attributes {dimension_semantics = [#tpu.dimension_semantics<arbitrary>], iteration_bounds = array<i64: 1>, scalar_prefetch = 0 : i64, scratch_operands = 2 : i64, tpu.core_type = #tpu.core_type<tc>, window_params = [{pipeline_mode = #tpu.pipeline_mode<synchronous>, transform_indices = @transform_0, window_bounds = array<i64: 1, 128>}, {pipeline_mode = #tpu.pipeline_mode<synchronous>, transform_indices = @transform_1, window_bounds = array<i64: 128, 1>}, {pipeline_mode = #tpu.pipeline_mode<synchronous>, transform_indices = @transform_2, window_bounds = array<i64: 16, 32>}, {pipeline_mode = #tpu.pipeline_mode<synchronous>, transform_indices = @transform_3, window_bounds = array<i64: 16, 32>}, {transform_indices = @transform_4, window_bounds = array<i64: 16, 16>}, {transform_indices = @transform_5, window_bounds = array<i64: 4>}]} {
    %c0_i32 = arith.constant 0 : i32
    %0 = arith.cmpi eq, %arg0, %c0_i32 : i32
    %1 = arith.extui %0 : i1 to i32
    %c0_i32_0 = arith.constant 0 : i32
    %2 = arith.cmpi ne, %1, %c0_i32_0 : i32
    scf.if %2 {
      %c0_11 = arith.constant 0 : index
      %c0_12 = arith.constant 0 : index
      %30 = vector.load %arg3[%c0_11, %c0_12] : memref<16x32xf32, #tpu.memory_space<vmem>>, vector<16x32xf32>
      %c0_13 = arith.constant 0 : index
      %c0_14 = arith.constant 0 : index
      %31 = vector.load %arg4[%c0_13, %c0_14] : memref<16x32xf32, #tpu.memory_space<vmem>>, vector<16x32xf32>
      %32 = arith.subf %30, %31 : vector<16x32xf32>
      %33 = arith.mulf %32, %32 : vector<16x32xf32>
      %34 = vector.shape_cast %33 : vector<16x32xf32> to vector<1x16x32xf32>
      %cst_15 = arith.constant dense<0.000000e+00> : vector<1xf32>
      %35 = vector.multi_reduction <add>, %34, %cst_15 [1, 2] : vector<1x16x32xf32> to vector<1xf32>
      %36 = vector.shape_cast %35 : vector<1xf32> to vector<1x1x1xf32>
      %37 = vector.extract %36[0, 0, 0] : f32 from vector<1x1x1xf32>
      %cst_16 = arith.constant 5.120000e+02 : f32
      %38 = arith.divf %37, %cst_16 : f32
      %c0_17 = arith.constant 0 : index
      %39 = memref.load %arg8[%c0_17] : memref<4xf32, #tpu.memory_space<smem>>
      memref.store %38, %arg8[%c0_17] : memref<4xf32, #tpu.memory_space<smem>>
      %c15_i32 = arith.constant 15 : i32
      %40 = tpu.dynamic_rotate %32 by %c15_i32 dim 0 : vector<16x32xf32>, i32 -> vector<16x32xf32>
      %41 = arith.subf %40, %32 : vector<16x32xf32>
      %42 = tpu.iota {dimensions = array<i32: 0>} : vector<16x32xi32>
      %c15_i32_18 = arith.constant 15 : i32
      %43 = vector.broadcast %c15_i32_18 : i32 to vector<16x32xi32>
      %44 = arith.cmpi slt, %42, %43 : vector<16x32xi32>
      %45 = arith.mulf %41, %41 : vector<16x32xf32>
      %cst_19 = arith.constant 0.000000e+00 : f32
      %46 = vector.broadcast %cst_19 : f32 to vector<16x32xf32>
      %47 = arith.select %44, %45, %46 : vector<16x32xi1>, vector<16x32xf32>
      %48 = vector.shape_cast %47 : vector<16x32xf32> to vector<1x16x32xf32>
      %cst_20 = arith.constant dense<0.000000e+00> : vector<1xf32>
      %49 = vector.multi_reduction <add>, %48, %cst_20 [1, 2] : vector<1x16x32xf32> to vector<1xf32>
      %50 = vector.shape_cast %49 : vector<1xf32> to vector<1x1x1xf32>
      %51 = vector.extract %50[0, 0, 0] : f32 from vector<1x1x1xf32>
      %cst_21 = arith.constant 4.800000e+02 : f32
      %52 = arith.divf %51, %cst_21 : f32
      %c1 = arith.constant 1 : index
      %53 = memref.load %arg8[%c1] : memref<4xf32, #tpu.memory_space<smem>>
      memref.store %52, %arg8[%c1] : memref<4xf32, #tpu.memory_space<smem>>
      %54 = tpu.iota {dimensions = array<i32: 1>} : vector<128x16xi32>
      %c0_22 = arith.constant 0 : index
      %c0_23 = arith.constant 0 : index
      %55 = vector.load %arg2[%c0_22, %c0_23] : memref<128x1xi32, #tpu.memory_space<vmem>>, vector<128x1xi32>
      %56 = vector.broadcast %55 : vector<128x1xi32> to vector<128x16xi32>
      %57 = arith.cmpi eq, %54, %56 : vector<128x16xi32>
      %58 = arith.extui %57 : vector<128x16xi1> to vector<128x16xi32>
      %59 = arith.sitofp %58 : vector<128x16xi32> to vector<128x16xf32>
      %60 = arith.truncf %59 : vector<128x16xf32> to vector<128x16xbf16>
      %c0_24 = arith.constant 0 : index
      %c0_25 = arith.constant 0 : index
      %61 = vector.load %arg7[%c0_24, %c0_25] : memref<128x16xbf16, #tpu.memory_space<vmem>>, vector<128x16xbf16>
      tpu.vector_store %arg7[%c0_24, %c0_25], %60 {strides = array<i32>} : memref<128x16xbf16, #tpu.memory_space<vmem>>, vector<128x16xbf16>,
      %cst_26 = arith.constant 0.000000e+00 : f32
      %c2_27 = arith.constant 2 : index
      %62 = memref.load %arg8[%c2_27] : memref<4xf32, #tpu.memory_space<smem>>
      memref.store %cst_26, %arg8[%c2_27] : memref<4xf32, #tpu.memory_space<smem>>
    } else {
    }
    %3 = tpu.iota {dimensions = array<i32: 0>} : vector<16x128xi32>
    %c16_i32 = arith.constant 16 : i32
    %4 = arith.muli %arg0, %c16_i32 : i32
    %5 = vector.broadcast %4 : i32 to vector<16x128xi32>
    %6 = arith.addi %3, %5 : vector<16x128xi32>
    %c0 = arith.constant 0 : index
    %c0_1 = arith.constant 0 : index
    %7 = vector.load %arg1[%c0, %c0_1] : memref<1x128xi32, #tpu.memory_space<vmem>>, vector<1x128xi32>
    %8 = vector.broadcast %7 : vector<1x128xi32> to vector<16x128xi32>
    %9 = arith.cmpi eq, %6, %8 : vector<16x128xi32>
    %10 = arith.extui %9 : vector<16x128xi1> to vector<16x128xi32>
    %11 = arith.sitofp %10 : vector<16x128xi32> to vector<16x128xf32>
    %12 = arith.truncf %11 : vector<16x128xf32> to vector<16x128xbf16>
    %c0_2 = arith.constant 0 : index
    %c0_3 = arith.constant 0 : index
    %13 = vector.load %arg7[%c0_2, %c0_3] : memref<128x16xbf16, #tpu.memory_space<vmem>>, vector<128x16xbf16>
    %cst = arith.constant dense<0.000000e+00> : vector<16x16xf32>
    %14 = tpu.matmul %12, %13, %cst {dimension_numbers = #tpu.dot_dimension_numbers<[1], [0], [0], [1], [0, 0, 1, 1], [], []>} : vector<16x128xbf16>, vector<128x16xbf16>, vector<16x16xf32> -> vector<16x16xf32>
    %cst_4 = arith.constant 1.000000e+00 : f32
    %15 = vector.broadcast %cst_4 : f32 to vector<16x16xf32>
    %16 = arith.minimumf %14, %15 : vector<16x16xf32>
    %c0_5 = arith.constant 0 : index
    %c0_6 = arith.constant 0 : index
    %17 = vector.load %arg5[%c0_5, %c0_6] : memref<16x16xf32, #tpu.memory_space<vmem>>, vector<16x16xf32>
    %18 = arith.subf %17, %16 : vector<16x16xf32>
    %c2 = arith.constant 2 : index
    %19 = memref.load %arg8[%c2] : memref<4xf32, #tpu.memory_space<smem>>
    %20 = arith.mulf %18, %18 : vector<16x16xf32>
    %21 = vector.shape_cast %20 : vector<16x16xf32> to vector<1x16x16xf32>
    %cst_7 = arith.constant dense<0.000000e+00> : vector<1xf32>
    %22 = vector.multi_reduction <add>, %21, %cst_7 [1, 2] : vector<1x16x16xf32> to vector<1xf32>
    %23 = vector.shape_cast %22 : vector<1xf32> to vector<1x1x1xf32>
    %24 = vector.extract %23[0, 0, 0] : f32 from vector<1x1x1xf32>
    %25 = arith.addf %19, %24 : f32
    %c2_8 = arith.constant 2 : index
    %26 = memref.load %arg8[%c2_8] : memref<4xf32, #tpu.memory_space<smem>>
    memref.store %25, %arg8[%c2_8] : memref<4xf32, #tpu.memory_space<smem>>
    %c0_i32_9 = arith.constant 0 : i32
    %27 = arith.cmpi eq, %arg0, %c0_i32_9 : i32
    %28 = arith.extui %27 : i1 to i32
    %c0_i32_10 = arith.constant 0 : i32
    %29 = arith.cmpi ne, %28, %c0_i32_10 : i32
    scf.if %29 {
      %c0_11 = arith.constant 0 : index
      %30 = memref.load %arg8[%c0_11] : memref<4xf32, #tpu.memory_space<smem>>
      %c1 = arith.constant 1 : index
      %31 = memref.load %arg8[%c1] : memref<4xf32, #tpu.memory_space<smem>>
      %c2_12 = arith.constant 2 : index
      %32 = memref.load %arg8[%c2_12] : memref<4xf32, #tpu.memory_space<smem>>
      %cst_13 = arith.constant 2.560000e+02 : f32
      %33 = arith.divf %32, %cst_13 : f32
      %cst_14 = arith.constant 4.000000e-01 : f32
      %34 = arith.mulf %cst_14, %30 : f32
      %cst_15 = arith.constant 4.000000e-01 : f32
      %35 = arith.mulf %cst_15, %33 : f32
      %36 = arith.addf %34, %35 : f32
      %cst_16 = arith.constant 2.000000e-01 : f32
      %37 = arith.mulf %cst_16, %31 : f32
      %38 = arith.addf %36, %37 : f32
      %c0_17 = arith.constant 0 : index
      %39 = memref.load %arg6[%c0_17] : memref<4xf32, #tpu.memory_space<smem>>
      memref.store %38, %arg6[%c0_17] : memref<4xf32, #tpu.memory_space<smem>>
      %c1_18 = arith.constant 1 : index
      %40 = memref.load %arg6[%c1_18] : memref<4xf32, #tpu.memory_space<smem>>
      memref.store %30, %arg6[%c1_18] : memref<4xf32, #tpu.memory_space<smem>>
      %c2_19 = arith.constant 2 : index
      %41 = memref.load %arg6[%c2_19] : memref<4xf32, #tpu.memory_space<smem>>
      memref.store %33, %arg6[%c2_19] : memref<4xf32, #tpu.memory_space<smem>>
      %c3 = arith.constant 3 : index
      %42 = memref.load %arg6[%c3] : memref<4xf32, #tpu.memory_space<smem>>
      memref.store %31, %arg6[%c3] : memref<4xf32, #tpu.memory_space<smem>>
    } else {
    }
    return
  }
  func.func @transform_0(%arg0: i32) -> (i32, i32) {
    %c0_i32 = arith.constant 0 : i32
    %c0_i32_0 = arith.constant 0 : i32
    %c0_i32_1 = arith.constant 0 : i32
    return %c0_i32, %c0_i32_0 : i32, i32
  }
  func.func @transform_1(%arg0: i32) -> (i32, i32) {
    %c0_i32 = arith.constant 0 : i32
    %c0_i32_0 = arith.constant 0 : i32
    %c0_i32_1 = arith.constant 0 : i32
    return %c0_i32, %c0_i32_0 : i32, i32
  }
  func.func @transform_2(%arg0: i32) -> (i32, i32) {
    %c0_i32 = arith.constant 0 : i32
    %c0_i32_0 = arith.constant 0 : i32
    %c0_i32_1 = arith.constant 0 : i32
    return %c0_i32, %c0_i32_0 : i32, i32
  }
  func.func @transform_3(%arg0: i32) -> (i32, i32) {
    %c0_i32 = arith.constant 0 : i32
    %c0_i32_0 = arith.constant 0 : i32
    %c0_i32_1 = arith.constant 0 : i32
    return %c0_i32, %c0_i32_0 : i32, i32
  }
  func.func @transform_4(%arg0: i32) -> (i32, i32) {
    %c0_i32 = arith.constant 0 : i32
    %c0_i32_0 = arith.constant 0 : i32
    return %arg0, %c0_i32 : i32, i32
  }
  func.func @transform_5(%arg0: i32) -> i32 {
    %c0_i32 = arith.constant 0 : i32
    %c0_i32_0 = arith.constant 0 : i32
    return %c0_i32 : i32
  }
}

</mosaic_0001>

<llo_original>
// kernel: tpu_custom_call.1
$region0: #{tpu_custom_call.1}
  #allocation0 [shape = 'u32[]', space=smem, size = 0x4, offset = 0x4, fixed_abs, tag = 'smem constant byte address 0x4 - core index']
  #allocation1 [shape = 'u32[72,128]{1,0:T(1,128)}', space=vmem, size = 0x9000, scoped, tag = 'internal scratch']
  #allocation2 [shape = 'bf16[128,16]{1,0:T(8,128)(2,1)}', space=vmem, size = 0x8000, scoped, tag = 'scratch operand']
  #allocation3 [shape = 'f32[4]{0:T(128)}', space=smem, size = 0x200, scoped, tag = 'scratch operand']
  %s0 = inlined_call_operand.vmem [shape: s32[1,128], index: 0, kind: input, shape index: {}]
  %s1 = inlined_call_operand.vmem [shape: s32[128,1], index: 1, kind: input, shape index: {}]
  %s2 = inlined_call_operand.vmem [shape: f32[16,32], index: 2, kind: input, shape index: {}]
  %s3 = inlined_call_operand.vmem [shape: f32[16,32], index: 3, kind: input, shape index: {}]
  %s4 = inlined_call_operand.vmem [shape: f32[16,16], index: 4, kind: input, shape index: {}]
  %s5 = inlined_call_operand.hbm [shape: f32[4], index: 5, kind: output, shape index: {}]
  %s6 = sld [smem:[#allocation0]]
  $region38: #{tpu_custom_call.1} parent=0
    _
  %s8 = ssub.s32 1, %s6
  %s9 = scalar_select 0, %s8, %s6
  $region1: #{tpu_custom_call.1} parent=0
    #allocation4 [shape = 'u8[512]{0}', space=smem, size = 0x200, scoped, tag = 'output window, operand 0, single buffered']
    #allocation5 [shape = 's32[1]{0}', space=sflag, size = 0x4, scoped, tag = 'scoped memory for tpu_custom_call.1']
    %10 = vsyncpa [#allocation5], 0
    // Predicated region
    $region2: #{tpu_custom_call.1} parent=1 // pred_check
      _
    $region3: #{tpu_custom_call.1} parent=1 // pred_check_branch
      %12 = sbr.rel (0) target = $region5
    $region4: #{tpu_custom_call.1} parent=1 // pred_region
      _
    $region5: #{tpu_custom_call.1} parent=1 // pred_fallthru
      _
    // Predicated region
    $region6: #{tpu_custom_call.1} parent=1 // pred_check
      _
    $region7: #{tpu_custom_call.1} parent=1 // pred_check_branch
      %14 = sbr.rel (0) target = $region9
    $region8: #{tpu_custom_call.1} parent=1 // pred_region
      _
    $region9: #{tpu_custom_call.1} parent=1 // pred_fallthru
      _
    // Predicated region
    $region10: #{tpu_custom_call.1} parent=1 // pred_check
      _
    $region11: #{tpu_custom_call.1} parent=1 // pred_check_branch
      %16 = sbr.rel (0) target = $region13
    $region12: #{tpu_custom_call.1} parent=1 // pred_region
      _
    $region13: #{tpu_custom_call.1} parent=1 // pred_fallthru
      _
    // Predicated region
    $region14: #{tpu_custom_call.1} parent=1 // pred_check
      _
    $region15: #{tpu_custom_call.1} parent=1 // pred_check_branch
      %18 = sbr.rel (0) target = $region17
    $region16: #{tpu_custom_call.1} parent=1 // pred_region
      _
    $region17: #{tpu_custom_call.1} parent=1 // pred_fallthru
      _
    // Predicated region
    $region18: #{tpu_custom_call.1} parent=1 // pred_check
      _
    $region19: #{tpu_custom_call.1} parent=1 // pred_check_branch
      %20 = sbr.rel (0) target = $region21
    $region20: #{tpu_custom_call.1} parent=1 // pred_region
      _
    $region21: #{tpu_custom_call.1} parent=1 // pred_fallthru
      _
    %p21 = scmp.eq.s32.totalorder 0, 0
    // Predicated region
    $region22: #{tpu_custom_call.1} parent=1 // pred_check
      %p22 = pneg %p21
    $region23: #{tpu_custom_call.1} parent=1 // pred_check_branch
      %24 = sbr.rel (%p22) target = $region25
    $region24: #{tpu_custom_call.1} parent=1 // pred_region
      %v25 = vld [vmem:[%s2] sm:$0xff]
      %v26 = vld [vmem:[%s2 + $0x8] sm:$0xff]
      %v27 = vld [vmem:[%s3] sm:$0xff]
      %v28 = vld [vmem:[%s3 + $0x8] sm:$0xff]
      %v29 = vsub.f32 %v25, %v27
      %v30 = vsub.f32 %v26, %v28
      %v31 = vmul.f32 %v29, %v29
      %v32 = vmul.f32 %v30, %v30
      %vm33 = vcmask 261120
      %v34 = vsel %vm33, %v31, 0.0
      %v35 = vsel %vm33, %v32, 0.0
      %v36 = vadd.f32 %v34, %v35
      %37 = vadd.xlane.f32.xlu0 %v36
      %v38 = vpop.xlane.xlu0 %37
      %v39 = vrot.slane %v38, 4
      %v40 = vadd.f32 %v38, %v39
      %v41 = vrot.slane %v40, 2
      %v42 = vadd.f32 %v40, %v41
      %v43 = vrot.slane %v42, 1
      %v44 = vadd.f32 %v42, %v43
      %s45 = vtos %v44
      %v46 = vrcp.pop 512.0
      %v47 = vmul.f32 512.0, %v46
      %v48 = vsub.f32 1.0, %v47
      %v49 = vmul.f32 %v46, %v48
      %v50 = vadd.f32 %v46, %v49
      %vm51 = vweird.f32 %v46
      %v52 = vsel %vm51, %v46, %v50
      %s53 = vtos %v52
      %s54 = smul.f32 %s45, %s53
      %s55 = scalar_lea.smem [#allocation3], 0
      %56 = sst [smem:[%s55]] %s54
      %v57 = vrot.slane %v29, 1
      %v58 = vrot.slane %v30, 1
      %v59 = vlaneseq
      %v60 = vshrl.u32 %v59, 7
      %vm61 = vcmp.lt.s32.totalorder %v60, 7
      %v62 = vsel %vm61, %v57, %v58
      %v63 = vsel %vm61, %v58, %v57
      %v64 = vsub.f32 %v62, %v29
      %v65 = vsub.f32 %v63, %v30
      %v66 = vadd.s32 %v60, 8
      %vm67 = vcmp.lt.s32.totalorder %v60, 15
      %vm68 = vcmp.lt.s32.totalorder %v66, 15
      %v69 = vmul.f32 %v64, %v64
      %v70 = vmul.f32 %v65, %v65
      %v71 = vsel %vm67, %v69, 0.0
      %v72 = vsel %vm68, %v70, 0.0
      %v73 = vsel %vm33, %v71, 0.0
      %v74 = vsel %vm33, %v72, 0.0
      %v75 = vadd.f32 %v73, %v74
      %76 = vadd.xlane.f32.xlu0 %v75
      %v77 = vpop.xlane.xlu0 %76
      %v78 = vrot.slane %v77, 4
      %v79 = vadd.f32 %v77, %v78
      %v80 = vrot.slane %v79, 2
      %v81 = vadd.f32 %v79, %v80
      %v82 = vrot.slane %v81, 1
      %v83 = vadd.f32 %v81, %v82
      %s84 = vtos %v83
      %v85 = vrcp.pop 480.0
      %v86 = vmul.f32 480.0, %v85
      %v87 = vsub.f32 1.0, %v86
      %v88 = vmul.f32 %v85, %v87
      %v89 = vadd.f32 %v85, %v88
      %vm90 = vweird.f32 %v85
      %v91 = vsel %vm90, %v85, %v89
      %s92 = vtos %v91
      %s93 = smul.f32 %s84, %s92
      %s94 = scalar_lea.smem [#allocation3], 1
      %95 = sst [smem:[%s94]] %s93
      %v96 = vlaneseq
      %v97 = vand.u32 %v96, 127
      %v98 = vld [vmem:[%s1] sm:$0xff]
      %v99 = vld [vmem:[%s1 + $0x8] sm:$0xff]
      %v100 = vld [vmem:[%s1 + $0x10] sm:$0xff]
      %v101 = vld [vmem:[%s1 + $0x18] sm:$0xff]
      %v102 = vld [vmem:[%s1 + $0x20] sm:$0xff]
      %v103 = vld [vmem:[%s1 + $0x28] sm:$0xff]
      %v104 = vld [vmem:[%s1 + $0x30] sm:$0xff]
      %v105 = vld [vmem:[%s1 + $0x38] sm:$0xff]
      %v106 = vld [vmem:[%s1 + $0x40] sm:$0xff]
      %v107 = vld [vmem:[%s1 + $0x48] sm:$0xff]
      %v108 = vld [vmem:[%s1 + $0x50] sm:$0xff]
      %v109 = vld [vmem:[%s1 + $0x58] sm:$0xff]
      %v110 = vld [vmem:[%s1 + $0x60] sm:$0xff]
      %v111 = vld [vmem:[%s1 + $0x68] sm:$0xff]
      %v112 = vld [vmem:[%s1 + $0x70] sm:$0xff]
      %v113 = vld [vmem:[%s1 + $0x78] sm:$0xff]
      %114 = vset.pattern.permute.xlu0 0
      %115 = vperm.xlu0 %114, %v98
      %v116 = vpop.permute.xlu0 %115
      %117 = vset.pattern.permute.xlu0 0
      %118 = vperm.xlu0 %117, %v99
      %v119 = vpop.permute.xlu0 %118
      %120 = vset.pattern.permute.xlu0 0
      %121 = vperm.xlu0 %120, %v100
      %v122 = vpop.permute.xlu0 %121
      %123 = vset.pattern.permute.xlu0 0
      %124 = vperm.xlu0 %123, %v101
      %v125 = vpop.permute.xlu0 %124
      %126 = vset.pattern.permute.xlu0 0
      %127 = vperm.xlu0 %126, %v102
      %v128 = vpop.permute.xlu0 %127
      %129 = vset.pattern.permute.xlu0 0
      %130 = vperm.xlu0 %129, %v103
      %v131 = vpop.permute.xlu0 %130
      %132 = vset.pattern.permute.xlu0 0
      %133 = vperm.xlu0 %132, %v104
      %v134 = vpop.permute.xlu0 %133
      %135 = vset.pattern.permute.xlu0 0
      %136 = vperm.xlu0 %135, %v105
      %v137 = vpop.permute.xlu0 %136
      %138 = vset.pattern.permute.xlu0 0
      %139 = vperm.xlu0 %138, %v106
      %v140 = vpop.permute.xlu0 %139
      %141 = vset.pattern.permute.xlu0 0
      %142 = vperm.xlu0 %141, %v107
      %v143 = vpop.permute.xlu0 %142
      %144 = vset.pattern.permute.xlu0 0
      %145 = vperm.xlu0 %144, %v108
      %v146 = vpop.permute.xlu0 %145
      %147 = vset.pattern.permute.xlu0 0
      %148 = vperm.xlu0 %147, %v109
      %v149 = vpop.permute.xlu0 %148
      %150 = vset.pattern.permute.xlu0 0
      %151 = vperm.xlu0 %150, %v110
      %v152 = vpop.permute.xlu0 %151
      %153 = vset.pattern.permute.xlu0 0
      %154 = vperm.xlu0 %153, %v111
      %v155 = vpop.permute.xlu0 %154
      %156 = vset.pattern.permute.xlu0 0
      %157 = vperm.xlu0 %156, %v112
      %v158 = vpop.permute.xlu0 %157
      %159 = vset.pattern.permute.xlu0 0
      %160 = vperm.xlu0 %159, %v113
      %v161 = vpop.permute.xlu0 %160
      %vm162 = vcmp.eq.s32.totalorder %v97, %v116
      %vm163 = vcmp.eq.s32.totalorder %v97, %v119
      %vm164 = vcmp.eq.s32.totalorder %v97, %v122
      %vm165 = vcmp.eq.s32.totalorder %v97, %v125
      %vm166 = vcmp.eq.s32.totalorder %v97, %v128
      %vm167 = vcmp.eq.s32.totalorder %v97, %v131
      %vm168 = vcmp.eq.s32.totalorder %v97, %v134
      %vm169 = vcmp.eq.s32.totalorder %v97, %v137
      %vm170 = vcmp.eq.s32.totalorder %v97, %v140
      %vm171 = vcmp.eq.s32.totalorder %v97, %v143
      %vm172 = vcmp.eq.s32.totalorder %v97, %v146
      %vm173 = vcmp.eq.s32.totalorder %v97, %v149
      %vm174 = vcmp.eq.s32.totalorder %v97, %v152
      %vm175 = vcmp.eq.s32.totalorder %v97, %v155
      %vm176 = vcmp.eq.s32.totalorder %v97, %v158
      %vm177 = vcmp.eq.s32.totalorder %v97, %v161
      %v178 = vsel %vm162, 1, 0
      %v179 = vsel %vm163, 1, 0
      %v180 = vsel %vm164, 1, 0
      %v181 = vsel %vm165, 1, 0
      %v182 = vsel %vm166, 1, 0
      %v183 = vsel %vm167, 1, 0
      %v184 = vsel %vm168, 1, 0
      %v185 = vsel %vm169, 1, 0
      %v186 = vsel %vm170, 1, 0
      %v187 = vsel %vm171, 1, 0
      %v188 = vsel %vm172, 1, 0
      %v189 = vsel %vm173, 1, 0
      %v190 = vsel %vm174, 1, 0
      %v191 = vsel %vm175, 1, 0
      %v192 = vsel %vm176, 1, 0
      %v193 = vsel %vm177, 1, 0
      %v194 = vcvt.s32.f32 %v178
      %v195 = vcvt.s32.f32 %v179
      %v196 = vcvt.s32.f32 %v180
      %v197 = vcvt.s32.f32 %v181
      %v198 = vcvt.s32.f32 %v182
      %v199 = vcvt.s32.f32 %v183
      %v200 = vcvt.s32.f32 %v184
      %v201 = vcvt.s32.f32 %v185
      %v202 = vcvt.s32.f32 %v186
      %v203 = vcvt.s32.f32 %v187
      %v204 = vcvt.s32.f32 %v188
      %v205 = vcvt.s32.f32 %v189
      %v206 = vcvt.s32.f32 %v190
      %v207 = vcvt.s32.f32 %v191
      %v208 = vcvt.s32.f32 %v192
      %v209 = vcvt.s32.f32 %v193
      %v210 = vpack.c.bf16 %v194, %v194
      %v211 = vpack.c.bf16 %v195, %v195
      %v212 = vpack.c.bf16 %v196, %v196
      %v213 = vpack.c.bf16 %v197, %v197
      %v214 = vpack.c.bf16 %v198, %v198
      %v215 = vpack.c.bf16 %v199, %v199
      %v216 = vpack.c.bf16 %v200, %v200
      %v217 = vpack.c.bf16 %v201, %v201
      %v218 = vpack.c.bf16 %v202, %v202
      %v219 = vpack.c.bf16 %v203, %v203
      %v220 = vpack.c.bf16 %v204, %v204
      %v221 = vpack.c.bf16 %v205, %v205
      %v222 = vpack.c.bf16 %v206, %v206
      %v223 = vpack.c.bf16 %v207, %v207
      %v224 = vpack.c.bf16 %v208, %v208
      %v225 = vpack.c.bf16 %v209, %v209
      %vm226 = vcmask 125952
      %227 = vst.msk [vmem:[#allocation2] sm:$0xf] %vm226, %v210
      %228 = vst.msk [vmem:[#allocation2 + $0x4] sm:$0xf] %vm226, %v211
      %229 = vst.msk [vmem:[#allocation2 + $0x8] sm:$0xf] %vm226, %v212
      %230 = vst.msk [vmem:[#allocation2 + $0xc] sm:$0xf] %vm226, %v213
      %231 = vst.msk [vmem:[#allocation2 + $0x10] sm:$0xf] %vm226, %v214
      %232 = vst.msk [vmem:[#allocation2 + $0x14] sm:$0xf] %vm226, %v215
      %233 = vst.msk [vmem:[#allocation2 + $0x18] sm:$0xf] %vm226, %v216
      %234 = vst.msk [vmem:[#allocation2 + $0x1c] sm:$0xf] %vm226, %v217
      %235 = vst.msk [vmem:[#allocation2 + $0x20] sm:$0xf] %vm226, %v218
      %236 = vst.msk [vmem:[#allocation2 + $0x24] sm:$0xf] %vm226, %v219
      %237 = vst.msk [vmem:[#allocation2 + $0x28] sm:$0xf] %vm226, %v220
      %238 = vst.msk [vmem:[#allocation2 + $0x2c] sm:$0xf] %vm226, %v221
      %239 = vst.msk [vmem:[#allocation2 + $0x30] sm:$0xf] %vm226, %v222
      %240 = vst.msk [vmem:[#allocation2 + $0x34] sm:$0xf] %vm226, %v223
      %241 = vst.msk [vmem:[#allocation2 + $0x38] sm:$0xf] %vm226, %v224
      %242 = vst.msk [vmem:[#allocation2 + $0x3c] sm:$0xf] %vm226, %v225
      %s243 = scalar_lea.smem [#allocation3], 2
      %244 = sst [smem:[%s243]] 0.0
    $region25: #{tpu_custom_call.1} parent=1 // pred_fallthru
      _
    %v245 = vlaneseq
    %v246 = vshrl.u32 %v245, 7
    %v247 = vadd.s32 %v246, 8
    %s248 = smul.u32 0, 16
    %v249 = vstv %s248
    %v250 = vadd.s32 %v246, %v249
    %v251 = vadd.s32 %v247, %v249
    %v252 = vld [vmem:[%s0] sm:$0x1]
    %v253 = vperm.slane %v252, 0
    %vm254 = vcmp.eq.s32.totalorder %v250, %v253
    %vm255 = vcmp.eq.s32.totalorder %v251, %v253
    %v256 = vsel %vm254, 1, 0
    %v257 = vsel %vm255, 1, 0
    %v258 = vcvt.s32.f32 %v256
    %v259 = vcvt.s32.f32 %v257
    %v260 = vpack.c.bf16 %v259, %v258
    %v261 = vld [vmem:[#allocation2] sm:$0xf]
    %v262 = vld [vmem:[#allocation2 + $0x4] sm:$0xf]
    %v263 = vld [vmem:[#allocation2 + $0x8] sm:$0xf]
    %v264 = vld [vmem:[#allocation2 + $0xc] sm:$0xf]
    %v265 = vld [vmem:[#allocation2 + $0x10] sm:$0xf]
    %v266 = vld [vmem:[#allocation2 + $0x14] sm:$0xf]
    %v267 = vld [vmem:[#allocation2 + $0x18] sm:$0xf]
    %v268 = vld [vmem:[#allocation2 + $0x1c] sm:$0xf]
    %v269 = vld [vmem:[#allocation2 + $0x20] sm:$0xf]
    %v270 = vld [vmem:[#allocation2 + $0x24] sm:$0xf]
    %v271 = vld [vmem:[#allocation2 + $0x28] sm:$0xf]
    %v272 = vld [vmem:[#allocation2 + $0x2c] sm:$0xf]
    %v273 = vld [vmem:[#allocation2 + $0x30] sm:$0xf]
    %v274 = vld [vmem:[#allocation2 + $0x34] sm:$0xf]
    %v275 = vld [vmem:[#allocation2 + $0x38] sm:$0xf]
    %v276 = vld [vmem:[#allocation2 + $0x3c] sm:$0xf]
    %v293 = vunpack.c.l.b16 %v261
    %v294 = vunpack.c.l.b16 %v262
    %v295 = vunpack.c.l.b16 %v263
    %v296 = vunpack.c.l.b16 %v264
    %v297 = vunpack.c.l.b16 %v265
    %v298 = vunpack.c.l.b16 %v266
    %v299 = vunpack.c.l.b16 %v267
    %v300 = vunpack.c.l.b16 %v268
    %v301 = vunpack.c.l.b16 %v269
    %v302 = vunpack.c.l.b16 %v270
    %v303 = vunpack.c.l.b16 %v271
    %v304 = vunpack.c.l.b16 %v272
    %v305 = vunpack.c.l.b16 %v273
    %v306 = vunpack.c.l.b16 %v274
    %v307 = vunpack.c.l.b16 %v275
    %v308 = vunpack.c.l.b16 %v276
    %v309 = vpack.c.b16 %v294, %v293
    %v310 = vpack.c.b16 %v296, %v295
    %v311 = vpack.c.b16 %v298, %v297
    %v312 = vpack.c.b16 %v300, %v299
    %v313 = vpack.c.b16 %v302, %v301
    %v314 = vpack.c.b16 %v304, %v303
    %v315 = vpack.c.b16 %v306, %v305
    %v316 = vpack.c.b16 %v308, %v307
    %325 = vmatpush.bf16.msra.mxu0 %v316
    %326 = vmatpush.bf16.msra.mxu0 %v315
    %327 = vmatpush.bf16.msra.mxu0 %v314
    %328 = vmatpush.bf16.msra.mxu0 %v313
    %329 = vmatpush.bf16.msra.mxu0 %v312
    %330 = vmatpush.bf16.msra.mxu0 %v311
    %331 = vmatpush.bf16.msra.mxu0 %v310
    %332 = vmatpush.bf16.msra.mxu0 %v309
    %333 = vmatmul.bf16.gmra.mxu0 %v260
    %v334 = vpop.f32.mrf.mxu0
    %v335 = vadd.f32 0.0, %v334
    %v336 = vpop.f32.mrf.mxu0
    %v337 = vadd.f32 0.0, %v336
    %338 = vdwg.mxu0
    %v339 = vmin.f32 %v335, 1.0
    %v340 = vmin.f32 %v337, 1.0
    %v341 = vld [vmem:[%s4] sm:$0xff]
    %v342 = vld [vmem:[%s4 + $0x8] sm:$0xff]
    %v343 = vsub.f32 %v341, %v339
    %v344 = vsub.f32 %v342, %v340
    %s345 = sld [smem:[#allocation3 + $0x2]]
    %v346 = vmul.f32 %v343, %v343
    %v347 = vmul.f32 %v344, %v344
    %vm348 = vcmask 130048
    %v349 = vsel %vm348, %v346, 0.0
    %v350 = vsel %vm348, %v347, 0.0
    %v351 = vadd.f32 %v349, %v350
    %352 = vadd.xlane.f32.xlu0 %v351
    %v353 = vpop.xlane.xlu0 %352
    %v354 = vrot.slane %v353, 4
    %v355 = vadd.f32 %v353, %v354
    %v356 = vrot.slane %v355, 2
    %v357 = vadd.f32 %v355, %v356
    %v358 = vrot.slane %v357, 1
    %v359 = vadd.f32 %v357, %v358
    %s360 = vtos %v359
    %s361 = sadd.f32 %s345, %s360
    %s362 = scalar_lea.smem [#allocation3], 2
    %363 = sst [smem:[%s362]] %s361
    // Predicated region
    $region26: #{tpu_custom_call.1} parent=1 // pred_check
      %p364 = pneg %p21
    $region27: #{tpu_custom_call.1} parent=1 // pred_check_branch
      %366 = sbr.rel (%p364) target = $region29
    $region28: #{tpu_custom_call.1} parent=1 // pred_region
      %s367 = sld [smem:[#allocation3]]
      %s368 = sld [smem:[#allocation3 + $0x1]]
      %s369 = sld [smem:[#allocation3 + $0x2]]
      %v370 = vrcp.pop 256.0
      %v371 = vmul.f32 256.0, %v370
      %v372 = vsub.f32 1.0, %v371
      %v373 = vmul.f32 %v370, %v372
      %v374 = vadd.f32 %v370, %v373
      %vm375 = vweird.f32 %v370
      %v376 = vsel %vm375, %v370, %v374
      %s377 = vtos %v376
      %s378 = smul.f32 %s369, %s377
      %s379 = smul.f32 %s367, 0.4
      %s380 = smul.f32 %s378, 0.4
      %s381 = sadd.f32 %s379, %s380
      %s382 = smul.f32 %s368, 0.2
      %s383 = sadd.f32 %s381, %s382
      %s384 = scalar_lea.smem [#allocation4], 0
      %385 = sst [smem:[%s384]] %s383
      %s386 = scalar_lea.smem [#allocation4], 1
      %387 = sst [smem:[%s386]] %s367
      %s388 = scalar_lea.smem [#allocation4], 2
      %389 = sst [smem:[%s388]] %s378
      %s390 = scalar_lea.smem [#allocation4], 3
      %391 = sst [smem:[%s390]] %s368
    $region29: #{tpu_custom_call.1} parent=1 // pred_fallthru
      _
    // Predicated region
    $region30: #{tpu_custom_call.1} parent=1 // pred_check
      _
    $region31: #{tpu_custom_call.1} parent=1 // pred_check_branch
      %393 = sbr.rel (0) target = $region33
    $region32: #{tpu_custom_call.1} parent=1 // pred_region
      %395 = vsyncadd [#allocation5], 0
      %s397 = sshll.u32 %s5, 4
      %s398 = int_to_ptr.hbm [resolvable:$true] %s397
      %400 = dma.smem_to_hbm [#allocation4], 16, %s398, [#allocation5]
    $region33: #{tpu_custom_call.1} parent=1 // pred_fallthru
      _
    // Predicated region
    $region34: #{tpu_custom_call.1} parent=1 // pred_check
      _
    $region35: #{tpu_custom_call.1} parent=1 // pred_check_branch
      %402 = sbr.rel (0) target = $region37
    $region36: #{tpu_custom_call.1} parent=1 // pred_region
      %404 = dma.done [#allocation5], 16
    $region37: #{tpu_custom_call.1} parent=1 // pred_fallthru
      _
    %405 = sfence
    %406 = vsyncpa [#allocation5], 1

</llo_original>
